<compile_context>
chip_gen: v7x
topology: tpu7x:2x2x1
jax: 0.10.0
libtpu: 0.0.40
codegen_flags: <defaults>
</compile_context>

<pallas_src>
import functools

import jax
import jax.numpy as jnp
from jax.experimental import pallas as pl
from jax.experimental.pallas import tpu as pltpu

D_IN, D_HID, D_OUT = 1024, 128, 14
D_OUT_PAD = 128          # lane-dense padded output width
TILE_B_MAX = 512         # batch tile rows; fits comfortably in v7x scoped VMEM
BN_EPS = 1e-5
LEAKY_SLOPE = 0.1


def _round_up(n, m):
    return (n + m - 1) // m * m


def qrator_kernel(x_ref, w1_ref, gamma_ref, beta_ref, w2_ref, b2_ref,
                  out_ref, sum_ref, ssq_ref, *, b_actual, tile_b):
    p = pl.program_id(0)     # 0: accumulate BN stats over full batch, 1: emit output
    i = pl.program_id(1)     # batch tile index

    # First matmul (bf16 operands, f32 accumulation) -- needed in both passes.
    h = jnp.dot(x_ref[...], w1_ref[...],
                preferred_element_type=jnp.float32)              # (TB, 128) f32

    @pl.when(jnp.logical_and(p == 0, i == 0))
    def _init_stats():
        sum_ref[...] = jnp.zeros_like(sum_ref)
        ssq_ref[...] = jnp.zeros_like(ssq_ref)

    @pl.when(p == 0)
    def _accumulate():
        if b_actual % tile_b == 0:
            hm = h
        else:
            # Mask zero-padded batch rows out of the statistics.
            row = i * tile_b + jax.lax.broadcasted_iota(jnp.int32, (tile_b, 1), 0)
            hm = jnp.where(row < b_actual, h, 0.0)
        sum_ref[...] = sum_ref[...] + jnp.sum(hm, axis=0, keepdims=True)
        ssq_ref[...] = ssq_ref[...] + jnp.sum(hm * hm, axis=0, keepdims=True)

    @pl.when(p == 1)
    def _normalize_and_project():
        n = jnp.float32(b_actual)
        mean = sum_ref[...] / n                                   # (1, 128)
        var = jnp.maximum(ssq_ref[...] / n - mean * mean, 0.0)    # biased var
        # Fold gamma * rsqrt(var + eps) into a single per-feature scale/shift.
        scale = gamma_ref[...] * jax.lax.rsqrt(var + BN_EPS)
        shift = beta_ref[...] - mean * scale
        hn = h * scale + shift
        hn = jnp.where(hn >= 0, hn, LEAKY_SLOPE * hn)             # LeakyReLU(0.1)
        # Second matmul against lane-padded w2 -> lane-dense (TB, 128) store.
        c = jnp.dot(hn, w2_ref[...],
                    preferred_element_type=jnp.float32) + b2_ref[...]
        out_ref[...] = c


@jax.jit
def qrator_forward(x, w1, gamma, beta, w2, b2):
    """Returns (c_discrete, c_mu, c_var), matching Qrator.forward semantics
    (training-mode BatchNorm, i.e. batch statistics, biased variance)."""
    B = x.shape[0]
    tile_b = min(TILE_B_MAX, _round_up(B, 8))
    b_pad = _round_up(B, tile_b)
    nb = b_pad // tile_b

    x_bf = x.astype(jnp.bfloat16)
    if b_pad != B:
        x_bf = jnp.pad(x_bf, ((0, b_pad - B), (0, 0)))
    w1_bf = w1.astype(jnp.bfloat16)
    gamma2 = gamma.reshape(1, D_HID).astype(jnp.float32)
    beta2 = beta.reshape(1, D_HID).astype(jnp.float32)
    # Zero-pad the head weights to 128 output lanes (unmasked MXU result/stores).
    w2p = jnp.zeros((D_HID, D_OUT_PAD), jnp.float32).at[:, :D_OUT].set(w2)
    b2p = jnp.zeros((1, D_OUT_PAD), jnp.float32).at[:, :D_OUT].set(
        b2.reshape(1, D_OUT))

    kernel = functools.partial(qrator_kernel, b_actual=B, tile_b=tile_b)
    resident = lambda shape: pl.BlockSpec(shape, lambda p, i: (0, 0))

    c_pad = pl.pallas_call(
        kernel,
        out_shape=jax.ShapeDtypeStruct((b_pad, D_OUT_PAD), jnp.float32),
        grid_spec=pltpu.PrefetchScalarGridSpec(
            num_scalar_prefetch=0,
            grid=(2, nb),                      # (pass, batch-tile)
            in_specs=[
                pl.BlockSpec((tile_b, D_IN), lambda p, i: (i, 0)),   # x tile
                resident((D_IN, D_HID)),                             # w1 (bf16)
                resident((1, D_HID)),                                # gamma
                resident((1, D_HID)),                                # beta
                resident((D_HID, D_OUT_PAD)),                        # w2 padded
                resident((1, D_OUT_PAD)),                            # b2 padded
            ],
            # Pass 0 parks the output window on block 0 (never written);
            # pass 1 writes lane-dense tile i.  No garbage ever reaches HBM.
            out_specs=pl.BlockSpec((tile_b, D_OUT_PAD), lambda p, i: (i * p, 0)),
            scratch_shapes=[
                pltpu.VMEM((1, D_HID), jnp.float32),   # sum of h
                pltpu.VMEM((1, D_HID), jnp.float32),   # sum of h^2
            ],
        ),
        compiler_params=pltpu.CompilerParams(
            dimension_semantics=("arbitrary", "arbitrary")),
    )(x_bf, w1_bf, gamma2, beta2, w2p, b2p)

    # Tiny head on the (B, 14) slice -- layout plumbing in the wrapper.
    c = c_pad[:B, :D_OUT]
    c_discrete = jax.nn.softmax(c[:, :10], axis=-1)
    c_mu = c[:, 10:12]
    c_var = jnp.exp(c[:, 12:14])
    return c_discrete, c_mu, c_var


def qrator_ref(x, w1, gamma, beta, w2, b2):
    """Pure-JAX reference (same bf16 first matmul / f32 second matmul)."""
    h = jnp.dot(x.astype(jnp.bfloat16), w1.astype(jnp.bfloat16),
                preferred_element_type=jnp.float32)
    mean = jnp.mean(h, axis=0, keepdims=True)
    var = jnp.mean((h - mean) ** 2, axis=0, keepdims=True)
    hn = (h - mean) * jax.lax.rsqrt(var + BN_EPS) * gamma + beta
    hn = jnp.where(hn >= 0, hn, LEAKY_SLOPE * hn)
    c = jnp.dot(hn, w2, precision=jax.lax.Precision.HIGHEST,
                preferred_element_type=jnp.float32) + b2
    return (jax.nn.softmax(c[:, :10], axis=-1), c[:, 10:12],
            jnp.exp(c[:, 12:14]))


def init_params(key):
    """nn.Linear default init (uniform(+-1/sqrt(fan_in))); BatchNorm1d defaults
    (gamma=1, beta=0).  NOTE: the first Linear's bias is omitted on purpose --
    it is added before train-mode BatchNorm, whose batch-mean subtraction
    cancels it exactly, so it has no effect on the module output."""
    k1, k2, k3 = jax.random.split(key, 3)
    bound1 = 1.0 / jnp.sqrt(1024.0)
    w1 = jax.random.uniform(k1, (D_IN, D_HID), jnp.float32, -bound1, bound1)
    gamma = jnp.ones((1, D_HID), jnp.float32)
    beta = jnp.zeros((1, D_HID), jnp.float32)
    bound2 = 1.0 / jnp.sqrt(128.0)
    w2 = jax.random.uniform(k2, (D_HID, D_OUT), jnp.float32, -bound2, bound2)
    b2 = jax.random.uniform(k3, (1, D_OUT), jnp.float32, -bound2, bound2)
    return w1, gamma, beta, w2, b2


if __name__ == "__main__":
    key = jax.random.PRNGKey(0)
    kx, kp = jax.random.split(key)

    B = 8
    x = jax.random.normal(kx, (B, D_IN), jnp.float32)
    params = init_params(kp)

    c_discrete, c_mu, c_var = qrator_forward(x, *params)
    jax.block_until_ready((c_discrete, c_mu, c_var))

    # Shape / sanity checks.
    assert c_discrete.shape == (B, 10)
    assert c_mu.shape == (B, 2)
    assert c_var.shape == (B, 2)
    assert jnp.allclose(jnp.sum(c_discrete, axis=1), 1.0, atol=1e-5)
    assert bool(jnp.all(c_var > 0))

    # Pure-JAX reference comparison.
    r_discrete, r_mu, r_var = qrator_ref(x, *params)
    assert jnp.allclose(c_discrete, r_discrete, atol=1e-2, rtol=1e-2)
    assert jnp.allclose(c_mu, r_mu, atol=1e-2, rtol=1e-2)
    assert jnp.allclose(c_var, r_var, atol=1e-2, rtol=1e-2)

    print("KERNEL_OK")
</pallas_src>

<mosaic_0001>
module attributes {stable_mosaic.version = 11 : i64} {
  func.func @qrator_kernel(%arg0: i32, %arg1: i32, %arg2: memref<8x1024xbf16, #tpu.memory_space<vmem>>, %arg3: memref<1024x128xbf16, #tpu.memory_space<vmem>>, %arg4: memref<1x128xf32, #tpu.memory_space<vmem>>, %arg5: memref<1x128xf32, #tpu.memory_space<vmem>>, %arg6: memref<128x128xf32, #tpu.memory_space<vmem>>, %arg7: memref<1x128xf32, #tpu.memory_space<vmem>>, %arg8: memref<8x128xf32, #tpu.memory_space<vmem>>, %arg9: memref<1x128xf32, #tpu.memory_space<vmem>>, %arg10: memref<1x128xf32, #tpu.memory_space<vmem>>) attributes {dimension_semantics = [#tpu.dimension_semantics<arbitrary>, #tpu.dimension_semantics<arbitrary>], iteration_bounds = array<i64: 2, 1>, scalar_prefetch = 0 : i64, scratch_operands = 2 : i64, tpu.core_type = #tpu.core_type<tc>, window_params = [{transform_indices = @transform_0, window_bounds = array<i64: 8, 1024>}, {pipeline_mode = #tpu.pipeline_mode<synchronous>, transform_indices = @transform_1, window_bounds = array<i64: 1024, 128>}, {pipeline_mode = #tpu.pipeline_mode<synchronous>, transform_indices = @transform_2, window_bounds = array<i64: 1, 128>}, {pipeline_mode = #tpu.pipeline_mode<synchronous>, transform_indices = @transform_3, window_bounds = array<i64: 1, 128>}, {pipeline_mode = #tpu.pipeline_mode<synchronous>, transform_indices = @transform_4, window_bounds = array<i64: 128, 128>}, {pipeline_mode = #tpu.pipeline_mode<synchronous>, transform_indices = @transform_5, window_bounds = array<i64: 1, 128>}, {transform_indices = @transform_6, window_bounds = array<i64: 8, 128>}]} {
    %c0 = arith.constant 0 : index
    %c0_0 = arith.constant 0 : index
    %0 = vector.load %arg2[%c0, %c0_0] : memref<8x1024xbf16, #tpu.memory_space<vmem>>, vector<8x1024xbf16>
    %c0_1 = arith.constant 0 : index
    %c0_2 = arith.constant 0 : index
    %1 = vector.load %arg3[%c0_1, %c0_2] : memref<1024x128xbf16, #tpu.memory_space<vmem>>, vector<1024x128xbf16>
    %cst = arith.constant dense<0.000000e+00> : vector<8x128xf32>
    %2 = tpu.matmul %0, %1, %cst {dimension_numbers = #tpu.dot_dimension_numbers<[1], [0], [0], [1], [0, 0, 1, 1], [], []>} : vector<8x1024xbf16>, vector<1024x128xbf16>, vector<8x128xf32> -> vector<8x128xf32>
    %c0_i32 = arith.constant 0 : i32
    %3 = arith.cmpi eq, %arg0, %c0_i32 : i32
    %c0_i32_3 = arith.constant 0 : i32
    %4 = arith.cmpi eq, %arg1, %c0_i32_3 : i32
    %5 = arith.andi %3, %4 : i1
    %6 = arith.extui %5 : i1 to i32
    %c0_i32_4 = arith.constant 0 : i32
    %7 = arith.cmpi ne, %6, %c0_i32_4 : i32
    scf.if %7 {
      %cst_8 = arith.constant 0.000000e+00 : f32
      %14 = vector.broadcast %cst_8 : f32 to vector<1x128xf32>
      %c0_9 = arith.constant 0 : index
      %c0_10 = arith.constant 0 : index
      %15 = vector.load %arg9[%c0_9, %c0_10] : memref<1x128xf32, #tpu.memory_space<vmem>>, vector<1x128xf32>
      tpu.vector_store %arg9[%c0_9, %c0_10], %14 {strides = array<i32>} : memref<1x128xf32, #tpu.memory_space<vmem>>, vector<1x128xf32>,
      %cst_11 = arith.constant 0.000000e+00 : f32
      %16 = vector.broadcast %cst_11 : f32 to vector<1x128xf32>
      %c0_12 = arith.constant 0 : index
      %c0_13 = arith.constant 0 : index
      %17 = vector.load %arg10[%c0_12, %c0_13] : memref<1x128xf32, #tpu.memory_space<vmem>>, vector<1x128xf32>
      tpu.vector_store %arg10[%c0_12, %c0_13], %16 {strides = array<i32>} : memref<1x128xf32, #tpu.memory_space<vmem>>, vector<1x128xf32>,
    } else {
    }
    %c0_i32_5 = arith.constant 0 : i32
    %8 = arith.cmpi eq, %arg0, %c0_i32_5 : i32
    %9 = arith.extui %8 : i1 to i32
    %c0_i32_6 = arith.constant 0 : i32
    %10 = arith.cmpi ne, %9, %c0_i32_6 : i32
    scf.if %10 {
      %c0_8 = arith.constant 0 : index
      %c0_9 = arith.constant 0 : index
      %14 = vector.load %arg9[%c0_8, %c0_9] : memref<1x128xf32, #tpu.memory_space<vmem>>, vector<1x128xf32>
      %cst_10 = arith.constant dense<0.000000e+00> : vector<128xf32>
      %15 = vector.multi_reduction <add>, %2, %cst_10 [0] : vector<8x128xf32> to vector<128xf32>
      %16 = vector.shape_cast %15 : vector<128xf32> to vector<1x128xf32>
      %17 = arith.addf %14, %16 : vector<1x128xf32>
      %c0_11 = arith.constant 0 : index
      %c0_12 = arith.constant 0 : index
      %18 = vector.load %arg9[%c0_11, %c0_12] : memref<1x128xf32, #tpu.memory_space<vmem>>, vector<1x128xf32>
      tpu.vector_store %arg9[%c0_11, %c0_12], %17 {strides = array<i32>} : memref<1x128xf32, #tpu.memory_space<vmem>>, vector<1x128xf32>,
      %c0_13 = arith.constant 0 : index
      %c0_14 = arith.constant 0 : index
      %19 = vector.load %arg10[%c0_13, %c0_14] : memref<1x128xf32, #tpu.memory_space<vmem>>, vector<1x128xf32>
      %20 = arith.mulf %2, %2 : vector<8x128xf32>
      %cst_15 = arith.constant dense<0.000000e+00> : vector<128xf32>
      %21 = vector.multi_reduction <add>, %20, %cst_15 [0] : vector<8x128xf32> to vector<128xf32>
      %22 = vector.shape_cast %21 : vector<128xf32> to vector<1x128xf32>
      %23 = arith.addf %19, %22 : vector<1x128xf32>
      %c0_16 = arith.constant 0 : index
      %c0_17 = arith.constant 0 : index
      %24 = vector.load %arg10[%c0_16, %c0_17] : memref<1x128xf32, #tpu.memory_space<vmem>>, vector<1x128xf32>
      tpu.vector_store %arg10[%c0_16, %c0_17], %23 {strides = array<i32>} : memref<1x128xf32, #tpu.memory_space<vmem>>, vector<1x128xf32>,
    } else {
    }
    %c1_i32 = arith.constant 1 : i32
    %11 = arith.cmpi eq, %arg0, %c1_i32 : i32
    %12 = arith.extui %11 : i1 to i32
    %c0_i32_7 = arith.constant 0 : i32
    %13 = arith.cmpi ne, %12, %c0_i32_7 : i32
    scf.if %13 {
      %c0_8 = arith.constant 0 : index
      %c0_9 = arith.constant 0 : index
      %14 = vector.load %arg9[%c0_8, %c0_9] : memref<1x128xf32, #tpu.memory_space<vmem>>, vector<1x128xf32>
      %cst_10 = arith.constant 8.000000e+00 : f32
      %15 = vector.broadcast %cst_10 : f32 to vector<1x128xf32>
      %16 = arith.divf %14, %15 : vector<1x128xf32>
      %c0_11 = arith.constant 0 : index
      %c0_12 = arith.constant 0 : index
      %17 = vector.load %arg10[%c0_11, %c0_12] : memref<1x128xf32, #tpu.memory_space<vmem>>, vector<1x128xf32>
      %cst_13 = arith.constant 8.000000e+00 : f32
      %18 = vector.broadcast %cst_13 : f32 to vector<1x128xf32>
      %19 = arith.divf %17, %18 : vector<1x128xf32>
      %20 = arith.mulf %16, %16 : vector<1x128xf32>
      %21 = arith.subf %19, %20 : vector<1x128xf32>
      %cst_14 = arith.constant 0.000000e+00 : f32
      %22 = vector.broadcast %cst_14 : f32 to vector<1x128xf32>
      %23 = arith.maximumf %21, %22 : vector<1x128xf32>
      %c0_15 = arith.constant 0 : index
      %c0_16 = arith.constant 0 : index
      %24 = vector.load %arg4[%c0_15, %c0_16] : memref<1x128xf32, #tpu.memory_space<vmem>>, vector<1x128xf32>
      %cst_17 = arith.constant 9.99999974E-6 : f32
      %25 = vector.broadcast %cst_17 : f32 to vector<1x128xf32>
      %26 = arith.addf %23, %25 : vector<1x128xf32>
      %27 = math.rsqrt %26 : vector<1x128xf32>
      %28 = arith.mulf %24, %27 : vector<1x128xf32>
      %c0_18 = arith.constant 0 : index
      %c0_19 = arith.constant 0 : index
      %29 = vector.load %arg5[%c0_18, %c0_19] : memref<1x128xf32, #tpu.memory_space<vmem>>, vector<1x128xf32>
      %30 = arith.mulf %16, %28 : vector<1x128xf32>
      %31 = arith.subf %29, %30 : vector<1x128xf32>
      %32 = vector.broadcast %28 : vector<1x128xf32> to vector<8x128xf32>
      %33 = arith.mulf %2, %32 : vector<8x128xf32>
      %34 = vector.broadcast %31 : vector<1x128xf32> to vector<8x128xf32>
      %35 = arith.addf %33, %34 : vector<8x128xf32>
      %cst_20 = arith.constant 0.000000e+00 : f32
      %36 = vector.broadcast %cst_20 : f32 to vector<8x128xf32>
      %37 = arith.cmpf oge, %35, %36 : vector<8x128xf32>
      %cst_21 = arith.constant 1.000000e-01 : f32
      %38 = vector.broadcast %cst_21 : f32 to vector<8x128xf32>
      %39 = arith.mulf %38, %35 : vector<8x128xf32>
      %40 = arith.select %37, %35, %39 : vector<8x128xi1>, vector<8x128xf32>
      %c0_22 = arith.constant 0 : index
      %c0_23 = arith.constant 0 : index
      %41 = vector.load %arg6[%c0_22, %c0_23] : memref<128x128xf32, #tpu.memory_space<vmem>>, vector<128x128xf32>
      %cst_24 = arith.constant dense<0.000000e+00> : vector<8x128xf32>
      %42 = tpu.matmul %40, %41, %cst_24 {dimension_numbers = #tpu.dot_dimension_numbers<[1], [0], [0], [1], [0, 0, 1, 1], [], []>} : vector<8x128xf32>, vector<128x128xf32>, vector<8x128xf32> -> vector<8x128xf32>
      %c0_25 = arith.constant 0 : index
      %c0_26 = arith.constant 0 : index
      %43 = vector.load %arg7[%c0_25, %c0_26] : memref<1x128xf32, #tpu.memory_space<vmem>>, vector<1x128xf32>
      %44 = vector.broadcast %43 : vector<1x128xf32> to vector<8x128xf32>
      %45 = arith.addf %42, %44 : vector<8x128xf32>
      %c0_27 = arith.constant 0 : index
      %c0_28 = arith.constant 0 : index
      %46 = vector.load %arg8[%c0_27, %c0_28] : memref<8x128xf32, #tpu.memory_space<vmem>>, vector<8x128xf32>
      tpu.vector_store %arg8[%c0_27, %c0_28], %45 {strides = array<i32>} : memref<8x128xf32, #tpu.memory_space<vmem>>, vector<8x128xf32>,
    } else {
    }
    return
  }
  func.func @transform_0(%arg0: i32, %arg1: i32) -> (i32, i32) {
    %c0_i32 = arith.constant 0 : i32
    %c0_i32_0 = arith.constant 0 : i32
    return %arg1, %c0_i32 : i32, i32
  }
  func.func @transform_1(%arg0: i32, %arg1: i32) -> (i32, i32) {
    %c0_i32 = arith.constant 0 : i32
    %c0_i32_0 = arith.constant 0 : i32
    %c0_i32_1 = arith.constant 0 : i32
    return %c0_i32, %c0_i32_0 : i32, i32
  }
  func.func @transform_2(%arg0: i32, %arg1: i32) -> (i32, i32) {
    %c0_i32 = arith.constant 0 : i32
    %c0_i32_0 = arith.constant 0 : i32
    %c0_i32_1 = arith.constant 0 : i32
    return %c0_i32, %c0_i32_0 : i32, i32
  }
  func.func @transform_3(%arg0: i32, %arg1: i32) -> (i32, i32) {
    %c0_i32 = arith.constant 0 : i32
    %c0_i32_0 = arith.constant 0 : i32
    %c0_i32_1 = arith.constant 0 : i32
    return %c0_i32, %c0_i32_0 : i32, i32
  }
  func.func @transform_4(%arg0: i32, %arg1: i32) -> (i32, i32) {
    %c0_i32 = arith.constant 0 : i32
    %c0_i32_0 = arith.constant 0 : i32
    %c0_i32_1 = arith.constant 0 : i32
    return %c0_i32, %c0_i32_0 : i32, i32
  }
  func.func @transform_5(%arg0: i32, %arg1: i32) -> (i32, i32) {
    %c0_i32 = arith.constant 0 : i32
    %c0_i32_0 = arith.constant 0 : i32
    %c0_i32_1 = arith.constant 0 : i32
    return %c0_i32, %c0_i32_0 : i32, i32
  }
  func.func @transform_6(%arg0: i32, %arg1: i32) -> (i32, i32) {
    %0 = arith.muli %arg1, %arg0 : i32
    %c0_i32 = arith.constant 0 : i32
    %c0_i32_0 = arith.constant 0 : i32
    return %0, %c0_i32 : i32, i32
  }
}

</mosaic_0001>

<llo_original>
// kernel: qrator_forward.1
$region0: #{qrator_forward.1}
  #allocation0 [shape = 'u32[]', space=smem, size = 0x4, offset = 0x4, fixed_abs, tag = 'smem constant byte address 0x4 - core index']
  #allocation1 [shape = 'u32[144,128]{1,0:T(1,128)}', space=vmem, size = 0x12000, scoped, tag = 'internal scratch']
  #allocation2 [shape = 'f32[1,128]{1,0:T(1,128)}', space=vmem, size = 0x200, scoped, tag = 'scratch operand']
  #allocation3 [shape = 'f32[1,128]{1,0:T(1,128)}', space=vmem, size = 0x200, scoped, tag = 'scratch operand']
  %s0 = inlined_call_operand.vmem [shape: bf16[8,1024], index: 0, kind: input, shape index: {}]
  %s1 = inlined_call_operand.vmem [shape: bf16[1024,128], index: 1, kind: input, shape index: {}]
  %s2 = inlined_call_operand.vmem [shape: f32[1,128], index: 2, kind: input, shape index: {}]
  %s3 = inlined_call_operand.vmem [shape: f32[1,128], index: 3, kind: input, shape index: {}]
  %s4 = inlined_call_operand.vmem [shape: f32[128,128], index: 4, kind: input, shape index: {}]
  %s5 = inlined_call_operand.vmem [shape: f32[1,128], index: 5, kind: input, shape index: {}]
  %s6 = inlined_call_operand.vmem [shape: f32[8,128], index: 6, kind: output, shape index: {}]
  %s7 = sld [smem:[#allocation0]]
  $region69: #{qrator_forward.1} parent=0
    _
  %s9 = ssub.s32 1, %s7
  %s10 = scalar_select 0, %s9, %s7
  loop: start=0, step=1, limit=4
  $region2: #{qrator_forward.1} parent=0 // loop_pre_header
    _
  $region3: #{qrator_forward.1} parent=0 // loop_header
    %s12 = sphi 0, %s16
    %p13 = scmp.ge.s32.totalorder %s12, 4
    %s19 = sphi 0, %s31
    %s20 = sphi 0, %s27
    %s21 = sphi 0, %s19
    %s22 = sphi 0, %s20
    %s23 = sphi 0, %s21
    %s24 = sphi 0, %s22
    %s34 = sphi 0, %s36
    %s37 = sphi 0, %s34
    %s38 = sphi 0, %s37
    %s54 = sphi 0, %s38
    %s58 = sphi 0, %s58
    %s60 = sphi 0, %s58
    %s61 = sphi 0, %s60
    %s75 = sphi 0, %s61
    %s79 = sphi 0, %s79
    %s81 = sphi 0, %s79
    %s82 = sphi 0, %s81
    %s96 = sphi 0, %s82
    %s100 = sphi 0, %s100
    %s102 = sphi 0, %s100
    %s103 = sphi 0, %s102
    %s117 = sphi 0, %s103
    %s121 = sphi 0, %s121
    %s123 = sphi 0, %s121
    %s124 = sphi 0, %s123
    %s138 = sphi 0, %s124
    %s142 = sphi 0, %s142
    %s144 = sphi 0, %s142
    %s145 = sphi 0, %s144
    %s159 = sphi 0, %s145
    %s167 = sphi 0, %s169
    %s170 = sphi 0, %s167
    %s171 = sphi 0, %s170
    %s187 = sphi 0, %s171
  $region4: #{qrator_forward.1} parent=0 // loop_header_branch
    %15 = sbr.rel (%p13) target = $region8
  $region5: #{qrator_forward.1} parent=0 // loop_body
    %s17 = ssub.s32 %s12, 1
    %s18 = ssub.s32 %s12, 2
    %s25 = sadd.s32 1, %s20
    %p26 = scmp.ge.s32.totalorder %s25, 1
    %s27 = scalar_select %p26, 0, %s25
    %s28 = sadd.s32 1, %s19
    %s29 = scalar_select %p26, %s28, %s19
    %p30 = scmp.ge.s32.totalorder %s29, 2
    %s31 = scalar_select %p30, 0, %s29
    %s32 = ssub.s32 %s20, %s27
    %p33 = scmp.eq.s32.totalorder %s32, 0
    %s35 = sadd.s32 %s34, 1
    %s36 = scalar_select %p33, %s34, %s35
    %p39 = pneg %p33
    %p40 = scmp.eq.s32.totalorder %s12, 1
    %p41 = por %p39, %p40
    %p42 = scmp.ne.s32.totalorder %s34, %s37
    %p43 = scmp.eq.s32.totalorder %s12, 0
    %p44 = por %p42, %p43
    %p45 = scmp.ne.s32.totalorder %s34, %s37
    %p46 = scmp.eq.s32.totalorder %s17, 1
    %p47 = por %p45, %p46
    %p48 = scmp.ne.s32.totalorder %s37, %s38
    %p49 = scmp.eq.s32.totalorder %s17, 0
    %p50 = por %p48, %p49
    %p51 = scmp.ne.s32.totalorder %s37, %s38
    %p52 = scmp.eq.s32.totalorder %s18, 1
    %p53 = por %p51, %p52
    %p55 = scmp.ne.s32.totalorder %s38, %s54
    %p56 = scmp.eq.s32.totalorder %s18, 0
    %p57 = por %p55, %p56
    %s59 = sadd.s32 %s58, 1
    %p62 = scmp.eq.s32.totalorder %s12, 1
    %p63 = scmp.ne.s32.totalorder %s58, %s60
    %p64 = scmp.eq.s32.totalorder %s12, 0
    %p65 = por %p63, %p64
    %p66 = scmp.ne.s32.totalorder %s58, %s60
    %p67 = scmp.eq.s32.totalorder %s17, 1
    %p68 = por %p66, %p67
    %p69 = scmp.ne.s32.totalorder %s60, %s61
    %p70 = scmp.eq.s32.totalorder %s17, 0
    %p71 = por %p69, %p70
    %p72 = scmp.ne.s32.totalorder %s60, %s61
    %p73 = scmp.eq.s32.totalorder %s18, 1
    %p74 = por %p72, %p73
    %p76 = scmp.ne.s32.totalorder %s61, %s75
    %p77 = scmp.eq.s32.totalorder %s18, 0
    %p78 = por %p76, %p77
    %s80 = sadd.s32 %s79, 1
    %p83 = scmp.eq.s32.totalorder %s12, 1
    %p84 = scmp.ne.s32.totalorder %s79, %s81
    %p85 = scmp.eq.s32.totalorder %s12, 0
    %p86 = por %p84, %p85
    %p87 = scmp.ne.s32.totalorder %s79, %s81
    %p88 = scmp.eq.s32.totalorder %s17, 1
    %p89 = por %p87, %p88
    %p90 = scmp.ne.s32.totalorder %s81, %s82
    %p91 = scmp.eq.s32.totalorder %s17, 0
    %p92 = por %p90, %p91
    %p93 = scmp.ne.s32.totalorder %s81, %s82
    %p94 = scmp.eq.s32.totalorder %s18, 1
    %p95 = por %p93, %p94
    %p97 = scmp.ne.s32.totalorder %s82, %s96
    %p98 = scmp.eq.s32.totalorder %s18, 0
    %p99 = por %p97, %p98
    %s101 = sadd.s32 %s100, 1
    %p104 = scmp.eq.s32.totalorder %s12, 1
    %p105 = scmp.ne.s32.totalorder %s100, %s102
    %p106 = scmp.eq.s32.totalorder %s12, 0
    %p107 = por %p105, %p106
    %p108 = scmp.ne.s32.totalorder %s100, %s102
    %p109 = scmp.eq.s32.totalorder %s17, 1
    %p110 = por %p108, %p109
    %p111 = scmp.ne.s32.totalorder %s102, %s103
    %p112 = scmp.eq.s32.totalorder %s17, 0
    %p113 = por %p111, %p112
    %p114 = scmp.ne.s32.totalorder %s102, %s103
    %p115 = scmp.eq.s32.totalorder %s18, 1
    %p116 = por %p114, %p115
    %p118 = scmp.ne.s32.totalorder %s103, %s117
    %p119 = scmp.eq.s32.totalorder %s18, 0
    %p120 = por %p118, %p119
    %s122 = sadd.s32 %s121, 1
    %p125 = scmp.eq.s32.totalorder %s12, 1
    %p126 = scmp.ne.s32.totalorder %s121, %s123
    %p127 = scmp.eq.s32.totalorder %s12, 0
    %p128 = por %p126, %p127
    %p129 = scmp.ne.s32.totalorder %s121, %s123
    %p130 = scmp.eq.s32.totalorder %s17, 1
    %p131 = por %p129, %p130
    %p132 = scmp.ne.s32.totalorder %s123, %s124
    %p133 = scmp.eq.s32.totalorder %s17, 0
    %p134 = por %p132, %p133
    %p135 = scmp.ne.s32.totalorder %s123, %s124
    %p136 = scmp.eq.s32.totalorder %s18, 1
    %p137 = por %p135, %p136
    %p139 = scmp.ne.s32.totalorder %s124, %s138
    %p140 = scmp.eq.s32.totalorder %s18, 0
    %p141 = por %p139, %p140
    %s143 = sadd.s32 %s142, 1
    %p146 = scmp.eq.s32.totalorder %s12, 1
    %p147 = scmp.ne.s32.totalorder %s142, %s144
    %p148 = scmp.eq.s32.totalorder %s12, 0
    %p149 = por %p147, %p148
    %p150 = scmp.ne.s32.totalorder %s142, %s144
    %p151 = scmp.eq.s32.totalorder %s17, 1
    %p152 = por %p150, %p151
    %p153 = scmp.ne.s32.totalorder %s144, %s145
    %p154 = scmp.eq.s32.totalorder %s17, 0
    %p155 = por %p153, %p154
    %p156 = scmp.ne.s32.totalorder %s144, %s145
    %p157 = scmp.eq.s32.totalorder %s18, 1
    %p158 = por %p156, %p157
    %p160 = scmp.ne.s32.totalorder %s145, %s159
    %p161 = scmp.eq.s32.totalorder %s18, 0
    %p162 = por %p160, %p161
    %s163 = smul.u32 %s20, %s19
    %s164 = smul.u32 %s27, %s31
    %s165 = ssub.s32 %s163, %s164
    %p166 = scmp.eq.s32.totalorder %s165, 0
    %s168 = sadd.s32 %s167, 1
    %s169 = scalar_select %p166, %s167, %s168
    %p172 = pneg %p166
    %p173 = scmp.eq.s32.totalorder %s12, 1
    %p174 = por %p172, %p173
    %p175 = scmp.ne.s32.totalorder %s167, %s170
    %p176 = scmp.eq.s32.totalorder %s12, 0
    %p177 = por %p175, %p176
    %p178 = scmp.ne.s32.totalorder %s167, %s170
    %p179 = scmp.eq.s32.totalorder %s17, 1
    %p180 = por %p178, %p179
    %p181 = scmp.ne.s32.totalorder %s170, %s171
    %p182 = scmp.eq.s32.totalorder %s17, 0
    %p183 = por %p181, %p182
    %p184 = scmp.ne.s32.totalorder %s170, %s171
    %p185 = scmp.eq.s32.totalorder %s18, 1
    %p186 = por %p184, %p185
    %p188 = scmp.ne.s32.totalorder %s171, %s187
    %p189 = scmp.eq.s32.totalorder %s18, 0
    %p190 = por %p188, %p189
    %p191 = scmp.le.s32.totalorder 1, %s12
    %p192 = scmp.lt.s32.totalorder %s12, 3
    %p193 = pnand %p191, %p192
    %p194 = pneg %p193
    // Predicated region
    $region9: #{qrator_forward.1} parent=5 // pred_check
      _
    $region10: #{qrator_forward.1} parent=5 // pred_check_branch
      %196 = sbr.rel (%p193) target = $region12
    $region11: #{qrator_forward.1} parent=5 // pred_region
      %s197 = ssub.s32 %s12, 1
      // Predicated region
      $region13: #{qrator_forward.1} parent=11 // pred_check
        %p198 = pneg %p50
      $region14: #{qrator_forward.1} parent=11 // pred_check_branch
        %200 = sbr.rel (%p198) target = $region16
      $region15: #{qrator_forward.1} parent=11 // pred_region
        %p201 = scmp.lt.s32.totalorder %s22, 0
        %s202 = scalar_select %p201, %s22, 0
        %s203 = smul.addr %s202, 8
        %s204 = smul.addr %s203, 4
        %s205 = scalar_lea.vmem %s0, %s204
      $region16: #{qrator_forward.1} parent=11 // pred_fallthru
        _
      // Predicated region
      $region17: #{qrator_forward.1} parent=11 // pred_check
        %p206 = pneg %p71
      $region18: #{qrator_forward.1} parent=11 // pred_check_branch
        %208 = sbr.rel (%p206) target = $region20
      $region19: #{qrator_forward.1} parent=11 // pred_region
        _
      $region20: #{qrator_forward.1} parent=11 // pred_fallthru
        _
      // Predicated region
      $region21: #{qrator_forward.1} parent=11 // pred_check
        %p209 = pneg %p92
      $region22: #{qrator_forward.1} parent=11 // pred_check_branch
        %211 = sbr.rel (%p209) target = $region24
      $region23: #{qrator_forward.1} parent=11 // pred_region
        _
      $region24: #{qrator_forward.1} parent=11 // pred_fallthru
        _
      // Predicated region
      $region25: #{qrator_forward.1} parent=11 // pred_check
        %p212 = pneg %p113
      $region26: #{qrator_forward.1} parent=11 // pred_check_branch
        %214 = sbr.rel (%p212) target = $region28
      $region27: #{qrator_forward.1} parent=11 // pred_region
        _
      $region28: #{qrator_forward.1} parent=11 // pred_fallthru
        _
      // Predicated region
      $region29: #{qrator_forward.1} parent=11 // pred_check
        %p215 = pneg %p134
      $region30: #{qrator_forward.1} parent=11 // pred_check_branch
        %217 = sbr.rel (%p215) target = $region32
      $region31: #{qrator_forward.1} parent=11 // pred_region
        _
      $region32: #{qrator_forward.1} parent=11 // pred_fallthru
        _
      // Predicated region
      $region33: #{qrator_forward.1} parent=11 // pred_check
        %p218 = pneg %p155
      $region34: #{qrator_forward.1} parent=11 // pred_check_branch
        %220 = sbr.rel (%p218) target = $region36
      $region35: #{qrator_forward.1} parent=11 // pred_region
        _
      $region36: #{qrator_forward.1} parent=11 // pred_fallthru
        _
    $region12: #{qrator_forward.1} parent=5 // pred_fallthru
      _
    %p221 = scmp.lt.s32.totalorder %s12, 2
    // Predicated region
    $region37: #{qrator_forward.1} parent=5 // pred_check
      %p222 = pneg %p221
    $region38: #{qrator_forward.1} parent=5 // pred_check_branch
      %224 = sbr.rel (%p222) target = $region40
    $region39: #{qrator_forward.1} parent=5 // pred_region
      _
    $region40: #{qrator_forward.1} parent=5 // pred_fallthru
      _
    %p225 = scmp.le.s32.totalorder 1, %s12
    %p226 = scmp.lt.s32.totalorder %s12, 3
    %p227 = pnand %p225, %p226
    %p228 = pneg %p227
    // Predicated region
    $region41: #{qrator_forward.1} parent=5 // pred_check
      _
    $region42: #{qrator_forward.1} parent=5 // pred_check_branch
      %230 = sbr.rel (%p227) target = $region44
    $region43: #{qrator_forward.1} parent=5 // pred_region
      %s231 = ssub.s32 %s12, 1
      %p232 = scmp.lt.s32.totalorder %s22, 0
      %s233 = scalar_select %p232, %s22, 0
      %s234 = smul.addr %s233, 8
      %s235 = smul.addr %s234, 4
      %s236 = scalar_lea.vmem %s0, %s235
      %p237 = pneg %p50
      %p238 = pneg %p47
      %p239 = pneg %p71
      %p240 = pneg %p68
      %p241 = pneg %p92
      %p242 = pneg %p89
      %p243 = pneg %p113
      %p244 = pneg %p110
      %p245 = pneg %p134
      %p246 = pneg %p131
      %p247 = pneg %p155
      %p248 = pneg %p152
      %p249 = pneg %p183
      %p250 = pneg %p180
      %s251 = smul.u32 %s22, %s21
      %p252 = scmp.lt.s32.totalorder %s251, 0
      %s253 = scalar_select %p252, %s251, 0
      %s254 = smul.addr %s253, 8
      %s255 = scalar_lea.vmem %s6, %s254
      %p256 = scmp.lt.s32.totalorder %s22, 0
      %s257 = scalar_select %p256, %s22, 0
      %s258 = smul.addr %s257, 8
      %s259 = smul.addr %s258, 4
      %s260 = scalar_lea.vmem %s0, %s259
      %s261 = smul.u32 %s22, %s21
      %p262 = scmp.lt.s32.totalorder %s261, 0
      %s263 = scalar_select %p262, %s261, 0
      %s264 = smul.addr %s263, 8
      %s265 = scalar_lea.vmem %s6, %s264
      %s266 = smul.u32 %s22, %s21
      %v268 = vld [vmem:[%s260] sm:$0xff]
      %v269 = vld [vmem:[%s260 + $0x8] sm:$0xff]
      %v270 = vld [vmem:[%s260 + $0x10] sm:$0xff]
      %v271 = vld [vmem:[%s260 + $0x18] sm:$0xff]
      %v272 = vld [vmem:[%s1] sm:$0xf]
      %v273 = vld [vmem:[%s1 + $0x4] sm:$0xf]
      %v274 = vld [vmem:[%s1 + $0x8] sm:$0xf]
      %v275 = vld [vmem:[%s1 + $0xc] sm:$0xf]
      %v276 = vld [vmem:[%s1 + $0x10] sm:$0xf]
      %v277 = vld [vmem:[%s1 + $0x14] sm:$0xf]
      %v278 = vld [vmem:[%s1 + $0x18] sm:$0xf]
      %v279 = vld [vmem:[%s1 + $0x1c] sm:$0xf]
      %v280 = vld [vmem:[%s1 + $0x20] sm:$0xf]
      %v281 = vld [vmem:[%s1 + $0x24] sm:$0xf]
      %v282 = vld [vmem:[%s1 + $0x28] sm:$0xf]
      %v283 = vld [vmem:[%s1 + $0x2c] sm:$0xf]
      %v284 = vld [vmem:[%s1 + $0x30] sm:$0xf]
      %v285 = vld [vmem:[%s1 + $0x34] sm:$0xf]
      %v286 = vld [vmem:[%s1 + $0x38] sm:$0xf]
      %v287 = vld [vmem:[%s1 + $0x3c] sm:$0xf]
      %v288 = vld [vmem:[%s1 + $0x40] sm:$0xf]
      %v289 = vld [vmem:[%s1 + $0x44] sm:$0xf]
      %v290 = vld [vmem:[%s1 + $0x48] sm:$0xf]
      %v291 = vld [vmem:[%s1 + $0x4c] sm:$0xf]
      %v292 = vld [vmem:[%s1 + $0x50] sm:$0xf]
      %v293 = vld [vmem:[%s1 + $0x54] sm:$0xf]
      %v294 = vld [vmem:[%s1 + $0x58] sm:$0xf]
      %v295 = vld [vmem:[%s1 + $0x5c] sm:$0xf]
      %v296 = vld [vmem:[%s1 + $0x60] sm:$0xf]
      %v297 = vld [vmem:[%s1 + $0x64] sm:$0xf]
      %v298 = vld [vmem:[%s1 + $0x68] sm:$0xf]
      %v299 = vld [vmem:[%s1 + $0x6c] sm:$0xf]
      %v300 = vld [vmem:[%s1 + $0x70] sm:$0xf]
      %v301 = vld [vmem:[%s1 + $0x74] sm:$0xf]
      %v302 = vld [vmem:[%s1 + $0x78] sm:$0xf]
      %v303 = vld [vmem:[%s1 + $0x7c] sm:$0xf]
      %v304 = vld [vmem:[%s1 + $0x80] sm:$0xf]
      %v305 = vld [vmem:[%s1 + $0x84] sm:$0xf]
      %v306 = vld [vmem:[%s1 + $0x88] sm:$0xf]
      %v307 = vld [vmem:[%s1 + $0x8c] sm:$0xf]
      %v308 = vld [vmem:[%s1 + $0x90] sm:$0xf]
      %v309 = vld [vmem:[%s1 + $0x94] sm:$0xf]
      %v310 = vld [vmem:[%s1 + $0x98] sm:$0xf]
      %v311 = vld [vmem:[%s1 + $0x9c] sm:$0xf]
      %v312 = vld [vmem:[%s1 + $0xa0] sm:$0xf]
      %v313 = vld [vmem:[%s1 + $0xa4] sm:$0xf]
      %v314 = vld [vmem:[%s1 + $0xa8] sm:$0xf]
      %v315 = vld [vmem:[%s1 + $0xac] sm:$0xf]
      %v316 = vld [vmem:[%s1 + $0xb0] sm:$0xf]
      %v317 = vld [vmem:[%s1 + $0xb4] sm:$0xf]
      %v318 = vld [vmem:[%s1 + $0xb8] sm:$0xf]
      %v319 = vld [vmem:[%s1 + $0xbc] sm:$0xf]
      %v320 = vld [vmem:[%s1 + $0xc0] sm:$0xf]
      %v321 = vld [vmem:[%s1 + $0xc4] sm:$0xf]
      %v322 = vld [vmem:[%s1 + $0xc8] sm:$0xf]
      %v323 = vld [vmem:[%s1 + $0xcc] sm:$0xf]
      %v324 = vld [vmem:[%s1 + $0xd0] sm:$0xf]
      %v325 = vld [vmem:[%s1 + $0xd4] sm:$0xf]
      %v326 = vld [vmem:[%s1 + $0xd8] sm:$0xf]
      %v327 = vld [vmem:[%s1 + $0xdc] sm:$0xf]
      %v328 = vld [vmem:[%s1 + $0xe0] sm:$0xf]
      %v329 = vld [vmem:[%s1 + $0xe4] sm:$0xf]
      %v330 = vld [vmem:[%s1 + $0xe8] sm:$0xf]
      %v331 = vld [vmem:[%s1 + $0xec] sm:$0xf]
      %v332 = vld [vmem:[%s1 + $0xf0] sm:$0xf]
      %v333 = vld [vmem:[%s1 + $0xf4] sm:$0xf]
      %v334 = vld [vmem:[%s1 + $0xf8] sm:$0xf]
      %v335 = vld [vmem:[%s1 + $0xfc] sm:$0xf]
      %v336 = vld [vmem:[%s1 + $0x100] sm:$0xf]
      %v337 = vld [vmem:[%s1 + $0x104] sm:$0xf]
      %v338 = vld [vmem:[%s1 + $0x108] sm:$0xf]
      %v339 = vld [vmem:[%s1 + $0x10c] sm:$0xf]
      %v340 = vld [vmem:[%s1 + $0x110] sm:$0xf]
      %v341 = vld [vmem:[%s1 + $0x114] sm:$0xf]
      %v342 = vld [vmem:[%s1 + $0x118] sm:$0xf]
      %v343 = vld [vmem:[%s1 + $0x11c] sm:$0xf]
      %v344 = vld [vmem:[%s1 + $0x120] sm:$0xf]
      %v345 = vld [vmem:[%s1 + $0x124] sm:$0xf]
      %v346 = vld [vmem:[%s1 + $0x128] sm:$0xf]
      %v347 = vld [vmem:[%s1 + $0x12c] sm:$0xf]
      %v348 = vld [vmem:[%s1 + $0x130] sm:$0xf]
      %v349 = vld [vmem:[%s1 + $0x134] sm:$0xf]
      %v350 = vld [vmem:[%s1 + $0x138] sm:$0xf]
      %v351 = vld [vmem:[%s1 + $0x13c] sm:$0xf]
      %v352 = vld [vmem:[%s1 + $0x140] sm:$0xf]
      %v353 = vld [vmem:[%s1 + $0x144] sm:$0xf]
      %v354 = vld [vmem:[%s1 + $0x148] sm:$0xf]
      %v355 = vld [vmem:[%s1 + $0x14c] sm:$0xf]
      %v356 = vld [vmem:[%s1 + $0x150] sm:$0xf]
      %v357 = vld [vmem:[%s1 + $0x154] sm:$0xf]
      %v358 = vld [vmem:[%s1 + $0x158] sm:$0xf]
      %v359 = vld [vmem:[%s1 + $0x15c] sm:$0xf]
      %v360 = vld [vmem:[%s1 + $0x160] sm:$0xf]
      %v361 = vld [vmem:[%s1 + $0x164] sm:$0xf]
      %v362 = vld [vmem:[%s1 + $0x168] sm:$0xf]
      %v363 = vld [vmem:[%s1 + $0x16c] sm:$0xf]
      %v364 = vld [vmem:[%s1 + $0x170] sm:$0xf]
      %v365 = vld [vmem:[%s1 + $0x174] sm:$0xf]
      %v366 = vld [vmem:[%s1 + $0x178] sm:$0xf]
      %v367 = vld [vmem:[%s1 + $0x17c] sm:$0xf]
      %v368 = vld [vmem:[%s1 + $0x180] sm:$0xf]
      %v369 = vld [vmem:[%s1 + $0x184] sm:$0xf]
      %v370 = vld [vmem:[%s1 + $0x188] sm:$0xf]
      %v371 = vld [vmem:[%s1 + $0x18c] sm:$0xf]
      %v372 = vld [vmem:[%s1 + $0x190] sm:$0xf]
      %v373 = vld [vmem:[%s1 + $0x194] sm:$0xf]
      %v374 = vld [vmem:[%s1 + $0x198] sm:$0xf]
      %v375 = vld [vmem:[%s1 + $0x19c] sm:$0xf]
      %v376 = vld [vmem:[%s1 + $0x1a0] sm:$0xf]
      %v377 = vld [vmem:[%s1 + $0x1a4] sm:$0xf]
      %v378 = vld [vmem:[%s1 + $0x1a8] sm:$0xf]
      %v379 = vld [vmem:[%s1 + $0x1ac] sm:$0xf]
      %v380 = vld [vmem:[%s1 + $0x1b0] sm:$0xf]
      %v381 = vld [vmem:[%s1 + $0x1b4] sm:$0xf]
      %v382 = vld [vmem:[%s1 + $0x1b8] sm:$0xf]
      %v383 = vld [vmem:[%s1 + $0x1bc] sm:$0xf]
      %v384 = vld [vmem:[%s1 + $0x1c0] sm:$0xf]
      %v385 = vld [vmem:[%s1 + $0x1c4] sm:$0xf]
      %v386 = vld [vmem:[%s1 + $0x1c8] sm:$0xf]
      %v387 = vld [vmem:[%s1 + $0x1cc] sm:$0xf]
      %v388 = vld [vmem:[%s1 + $0x1d0] sm:$0xf]
      %v389 = vld [vmem:[%s1 + $0x1d4] sm:$0xf]
      %v390 = vld [vmem:[%s1 + $0x1d8] sm:$0xf]
      %v391 = vld [vmem:[%s1 + $0x1dc] sm:$0xf]
      %v392 = vld [vmem:[%s1 + $0x1e0] sm:$0xf]
      %v393 = vld [vmem:[%s1 + $0x1e4] sm:$0xf]
      %v394 = vld [vmem:[%s1 + $0x1e8] sm:$0xf]
      %v395 = vld [vmem:[%s1 + $0x1ec] sm:$0xf]
      %v396 = vld [vmem:[%s1 + $0x1f0] sm:$0xf]
      %v397 = vld [vmem:[%s1 + $0x1f4] sm:$0xf]
      %v398 = vld [vmem:[%s1 + $0x1f8] sm:$0xf]
      %v399 = vld [vmem:[%s1 + $0x1fc] sm:$0xf]
      %v404 = vunpack.c.l.b16 %v268
      %v405 = vunpack.c.h.b16 %v268
      %v406 = vunpack.c.l.b16 %v269
      %v407 = vunpack.c.h.b16 %v269
      %v408 = vunpack.c.l.b16 %v270
      %v409 = vunpack.c.h.b16 %v270
      %v410 = vunpack.c.l.b16 %v271
      %v411 = vunpack.c.h.b16 %v271
      %v412 = vpack.c.b16 %v404, %v404
      %v413 = vpack.c.b16 %v405, %v405
      %v414 = vpack.c.b16 %v406, %v406
      %v415 = vpack.c.b16 %v407, %v407
      %v416 = vpack.c.b16 %v408, %v408
      %v417 = vpack.c.b16 %v409, %v409
      %v418 = vpack.c.b16 %v410, %v410
      %v419 = vpack.c.b16 %v411, %v411
      %v556 = vunpack.c.l.b16 %v272
      %v557 = vunpack.c.l.b16 %v273
      %v558 = vunpack.c.l.b16 %v274
      %v559 = vunpack.c.l.b16 %v275
      %v560 = vunpack.c.l.b16 %v276
      %v561 = vunpack.c.l.b16 %v277
      %v562 = vunpack.c.l.b16 %v278
      %v563 = vunpack.c.l.b16 %v279
      %v564 = vunpack.c.l.b16 %v280
      %v565 = vunpack.c.l.b16 %v281
      %v566 = vunpack.c.l.b16 %v282
      %v567 = vunpack.c.l.b16 %v283
      %v568 = vunpack.c.l.b16 %v284
      %v569 = vunpack.c.l.b16 %v285
      %v570 = vunpack.c.l.b16 %v286
      %v571 = vunpack.c.l.b16 %v287
      %v572 = vunpack.c.l.b16 %v288
      %v573 = vunpack.c.l.b16 %v289
      %v574 = vunpack.c.l.b16 %v290
      %v575 = vunpack.c.l.b16 %v291
      %v576 = vunpack.c.l.b16 %v292
      %v577 = vunpack.c.l.b16 %v293
      %v578 = vunpack.c.l.b16 %v294
      %v579 = vunpack.c.l.b16 %v295
      %v580 = vunpack.c.l.b16 %v296
      %v581 = vunpack.c.l.b16 %v297
      %v582 = vunpack.c.l.b16 %v298
      %v583 = vunpack.c.l.b16 %v299
      %v584 = vunpack.c.l.b16 %v300
      %v585 = vunpack.c.l.b16 %v301
      %v586 = vunpack.c.l.b16 %v302
      %v587 = vunpack.c.l.b16 %v303
      %v588 = vunpack.c.l.b16 %v304
      %v589 = vunpack.c.l.b16 %v305
      %v590 = vunpack.c.l.b16 %v306
      %v591 = vunpack.c.l.b16 %v307
      %v592 = vunpack.c.l.b16 %v308
      %v593 = vunpack.c.l.b16 %v309
      %v594 = vunpack.c.l.b16 %v310
      %v595 = vunpack.c.l.b16 %v311
      %v596 = vunpack.c.l.b16 %v312
      %v597 = vunpack.c.l.b16 %v313
      %v598 = vunpack.c.l.b16 %v314
      %v599 = vunpack.c.l.b16 %v315
      %v600 = vunpack.c.l.b16 %v316
      %v601 = vunpack.c.l.b16 %v317
      %v602 = vunpack.c.l.b16 %v318
      %v603 = vunpack.c.l.b16 %v319
      %v604 = vunpack.c.l.b16 %v320
      %v605 = vunpack.c.l.b16 %v321
      %v606 = vunpack.c.l.b16 %v322
      %v607 = vunpack.c.l.b16 %v323
      %v608 = vunpack.c.l.b16 %v324
      %v609 = vunpack.c.l.b16 %v325
      %v610 = vunpack.c.l.b16 %v326
      %v611 = vunpack.c.l.b16 %v327
      %v612 = vunpack.c.l.b16 %v328
      %v613 = vunpack.c.l.b16 %v329
      %v614 = vunpack.c.l.b16 %v330
      %v615 = vunpack.c.l.b16 %v331
      %v616 = vunpack.c.l.b16 %v332
      %v617 = vunpack.c.l.b16 %v333
      %v618 = vunpack.c.l.b16 %v334
      %v619 = vunpack.c.l.b16 %v335
      %v620 = vunpack.c.l.b16 %v336
      %v621 = vunpack.c.l.b16 %v337
      %v622 = vunpack.c.l.b16 %v338
      %v623 = vunpack.c.l.b16 %v339
      %v624 = vunpack.c.l.b16 %v340
      %v625 = vunpack.c.l.b16 %v341
      %v626 = vunpack.c.l.b16 %v342
      %v627 = vunpack.c.l.b16 %v343
      %v628 = vunpack.c.l.b16 %v344
      %v629 = vunpack.c.l.b16 %v345
      %v630 = vunpack.c.l.b16 %v346
      %v631 = vunpack.c.l.b16 %v347
      %v632 = vunpack.c.l.b16 %v348
      %v633 = vunpack.c.l.b16 %v349
      %v634 = vunpack.c.l.b16 %v350
      %v635 = vunpack.c.l.b16 %v351
      %v636 = vunpack.c.l.b16 %v352
      %v637 = vunpack.c.l.b16 %v353
      %v638 = vunpack.c.l.b16 %v354
      %v639 = vunpack.c.l.b16 %v355
      %v640 = vunpack.c.l.b16 %v356
      %v641 = vunpack.c.l.b16 %v357
      %v642 = vunpack.c.l.b16 %v358
      %v643 = vunpack.c.l.b16 %v359
      %v644 = vunpack.c.l.b16 %v360
      %v645 = vunpack.c.l.b16 %v361
      %v646 = vunpack.c.l.b16 %v362
      %v647 = vunpack.c.l.b16 %v363
      %v648 = vunpack.c.l.b16 %v364
      %v649 = vunpack.c.l.b16 %v365
      %v650 = vunpack.c.l.b16 %v366
      %v651 = vunpack.c.l.b16 %v367
      %v652 = vunpack.c.l.b16 %v368
      %v653 = vunpack.c.l.b16 %v369
      %v654 = vunpack.c.l.b16 %v370
      %v655 = vunpack.c.l.b16 %v371
      %v656 = vunpack.c.l.b16 %v372
      %v657 = vunpack.c.l.b16 %v373
      %v658 = vunpack.c.l.b16 %v374
      %v659 = vunpack.c.l.b16 %v375
      %v660 = vunpack.c.l.b16 %v376
      %v661 = vunpack.c.l.b16 %v377
      %v662 = vunpack.c.l.b16 %v378
      %v663 = vunpack.c.l.b16 %v379
      %v664 = vunpack.c.l.b16 %v380
      %v665 = vunpack.c.l.b16 %v381
      %v666 = vunpack.c.l.b16 %v382
      %v667 = vunpack.c.l.b16 %v383
      %v668 = vunpack.c.l.b16 %v384
      %v669 = vunpack.c.l.b16 %v385
      %v670 = vunpack.c.l.b16 %v386
      %v671 = vunpack.c.l.b16 %v387
      %v672 = vunpack.c.l.b16 %v388
      %v673 = vunpack.c.l.b16 %v389
      %v674 = vunpack.c.l.b16 %v390
      %v675 = vunpack.c.l.b16 %v391
      %v676 = vunpack.c.l.b16 %v392
      %v677 = vunpack.c.l.b16 %v393
      %v678 = vunpack.c.l.b16 %v394
      %v679 = vunpack.c.l.b16 %v395
      %v680 = vunpack.c.l.b16 %v396
      %v681 = vunpack.c.l.b16 %v397
      %v682 = vunpack.c.l.b16 %v398
      %v683 = vunpack.c.l.b16 %v399
      %v684 = vpack.c.b16 %v557, %v556
      %v685 = vpack.c.b16 %v559, %v558
      %v686 = vpack.c.b16 %v561, %v560
      %v687 = vpack.c.b16 %v563, %v562
      %v688 = vpack.c.b16 %v565, %v564
      %v689 = vpack.c.b16 %v567, %v566
      %v690 = vpack.c.b16 %v569, %v568
      %v691 = vpack.c.b16 %v571, %v570
      %v692 = vpack.c.b16 %v573, %v572
      %v693 = vpack.c.b16 %v575, %v574
      %v694 = vpack.c.b16 %v577, %v576
      %v695 = vpack.c.b16 %v579, %v578
      %v696 = vpack.c.b16 %v581, %v580
      %v697 = vpack.c.b16 %v583, %v582
      %v698 = vpack.c.b16 %v585, %v584
      %v699 = vpack.c.b16 %v587, %v586
      %v700 = vpack.c.b16 %v589, %v588
      %v701 = vpack.c.b16 %v591, %v590
      %v702 = vpack.c.b16 %v593, %v592
      %v703 = vpack.c.b16 %v595, %v594
      %v704 = vpack.c.b16 %v597, %v596
      %v705 = vpack.c.b16 %v599, %v598
      %v706 = vpack.c.b16 %v601, %v600
      %v707 = vpack.c.b16 %v603, %v602
      %v708 = vpack.c.b16 %v605, %v604
      %v709 = vpack.c.b16 %v607, %v606
      %v710 = vpack.c.b16 %v609, %v608
      %v711 = vpack.c.b16 %v611, %v610
      %v712 = vpack.c.b16 %v613, %v612
      %v713 = vpack.c.b16 %v615, %v614
      %v714 = vpack.c.b16 %v617, %v616
      %v715 = vpack.c.b16 %v619, %v618
      %v716 = vpack.c.b16 %v621, %v620
      %v717 = vpack.c.b16 %v623, %v622
      %v718 = vpack.c.b16 %v625, %v624
      %v719 = vpack.c.b16 %v627, %v626
      %v720 = vpack.c.b16 %v629, %v628
      %v721 = vpack.c.b16 %v631, %v630
      %v722 = vpack.c.b16 %v633, %v632
      %v723 = vpack.c.b16 %v635, %v634
      %v724 = vpack.c.b16 %v637, %v636
      %v725 = vpack.c.b16 %v639, %v638
      %v726 = vpack.c.b16 %v641, %v640
      %v727 = vpack.c.b16 %v643, %v642
      %v728 = vpack.c.b16 %v645, %v644
      %v729 = vpack.c.b16 %v647, %v646
      %v730 = vpack.c.b16 %v649, %v648
      %v731 = vpack.c.b16 %v651, %v650
      %v732 = vpack.c.b16 %v653, %v652
      %v733 = vpack.c.b16 %v655, %v654
      %v734 = vpack.c.b16 %v657, %v656
      %v735 = vpack.c.b16 %v659, %v658
      %v736 = vpack.c.b16 %v661, %v660
      %v737 = vpack.c.b16 %v663, %v662
      %v738 = vpack.c.b16 %v665, %v664
      %v739 = vpack.c.b16 %v667, %v666
      %v740 = vpack.c.b16 %v669, %v668
      %v741 = vpack.c.b16 %v671, %v670
      %v742 = vpack.c.b16 %v673, %v672
      %v743 = vpack.c.b16 %v675, %v674
      %v744 = vpack.c.b16 %v677, %v676
      %v745 = vpack.c.b16 %v679, %v678
      %v746 = vpack.c.b16 %v681, %v680
      %v747 = vpack.c.b16 %v683, %v682
      %812 = vmatprep.subr.bf16.mxu0 0
      %813 = vmatpush1.bf16.msra.mxu0 %v684
      %814 = vmatprep.subr.bf16.mxu0 0
      %815 = vmatpush1.bf16.msra.mxu0 %v685
      %816 = vmatprep.subr.bf16.mxu0 0
      %817 = vmatpush1.bf16.msra.mxu0 %v686
      %818 = vmatprep.subr.bf16.mxu0 0
      %819 = vmatpush1.bf16.msra.mxu0 %v687
      %820 = vmatprep.subr.bf16.mxu0 0
      %821 = vmatpush1.bf16.msra.mxu0 %v688
      %822 = vmatprep.subr.bf16.mxu0 0
      %823 = vmatpush1.bf16.msra.mxu0 %v689
      %824 = vmatprep.subr.bf16.mxu0 0
      %825 = vmatpush1.bf16.msra.mxu0 %v690
      %826 = vmatprep.subr.bf16.mxu0 0
      %827 = vmatpush1.bf16.msra.mxu0 %v691
      %828 = vmatprep.subr.bf16.mxu0 0
      %829 = vmatpush1.bf16.msra.mxu0 %v692
      %830 = vmatprep.subr.bf16.mxu0 0
      %831 = vmatpush1.bf16.msra.mxu0 %v693
      %832 = vmatprep.subr.bf16.mxu0 0
      %833 = vmatpush1.bf16.msra.mxu0 %v694
      %834 = vmatprep.subr.bf16.mxu0 0
      %835 = vmatpush1.bf16.msra.mxu0 %v695
      %836 = vmatprep.subr.bf16.mxu0 0
      %837 = vmatpush1.bf16.msra.mxu0 %v696
      %838 = vmatprep.subr.bf16.mxu0 0
      %839 = vmatpush1.bf16.msra.mxu0 %v697
      %840 = vmatprep.subr.bf16.mxu0 0
      %841 = vmatpush1.bf16.msra.mxu0 %v698
      %842 = vmatprep.subr.bf16.mxu0 0
      %843 = vmatpush1.bf16.msra.mxu0 %v699
      %844 = vmatprep.mubr.bf16.mxu0 %v413
      %845 = vmatmul.mubr.bf16.gmra.mrb[0].mxu0 %v412
      %v846 = vpop.f32.mrb[0].mxu0
      %v847 = vadd.f32 0.0, %v846
      %v848 = vpop.f32.mrb[0].mxu0
      %v849 = vpop.f32.mrb[0].mxu0
      %v850 = vpop.f32.mrb[0].mxu0
      %851 = vdwg.mxu0
      %852 = vmatprep.subr.bf16.mxu0 0
      %853 = vmatpush1.bf16.msra.mxu0 %v700
      %854 = vmatprep.subr.bf16.mxu0 0
      %855 = vmatpush1.bf16.msra.mxu0 %v701
      %856 = vmatprep.subr.bf16.mxu0 0
      %857 = vmatpush1.bf16.msra.mxu0 %v702
      %858 = vmatprep.subr.bf16.mxu0 0
      %859 = vmatpush1.bf16.msra.mxu0 %v703
      %860 = vmatprep.subr.bf16.mxu0 0
      %861 = vmatpush1.bf16.msra.mxu0 %v704
      %862 = vmatprep.subr.bf16.mxu0 0
      %863 = vmatpush1.bf16.msra.mxu0 %v705
      %864 = vmatprep.subr.bf16.mxu0 0
      %865 = vmatpush1.bf16.msra.mxu0 %v706
      %866 = vmatprep.subr.bf16.mxu0 0
      %867 = vmatpush1.bf16.msra.mxu0 %v707
      %868 = vmatprep.subr.bf16.mxu0 0
      %869 = vmatpush1.bf16.msra.mxu0 %v708
      %870 = vmatprep.subr.bf16.mxu0 0
      %871 = vmatpush1.bf16.msra.mxu0 %v709
      %872 = vmatprep.subr.bf16.mxu0 0
      %873 = vmatpush1.bf16.msra.mxu0 %v710
      %874 = vmatprep.subr.bf16.mxu0 0
      %875 = vmatpush1.bf16.msra.mxu0 %v711
      %876 = vmatprep.subr.bf16.mxu0 0
      %877 = vmatpush1.bf16.msra.mxu0 %v712
      %878 = vmatprep.subr.bf16.mxu0 0
      %879 = vmatpush1.bf16.msra.mxu0 %v713
      %880 = vmatprep.subr.bf16.mxu0 0
      %881 = vmatpush1.bf16.msra.mxu0 %v714
      %882 = vmatprep.subr.bf16.mxu0 0
      %883 = vmatpush1.bf16.msra.mxu0 %v715
      %884 = vmatprep.mubr.bf16.mxu0 %v415
      %885 = vmatmul.mubr.bf16.gmra.mrb[0].mxu0 %v414
      %v886 = vpop.f32.mrb[0].mxu0
      %v887 = vadd.f32 %v847, %v886
      %v888 = vpop.f32.mrb[0].mxu0
      %v889 = vpop.f32.mrb[0].mxu0
      %v890 = vpop.f32.mrb[0].mxu0
      %891 = vdwg.mxu0
      %892 = vmatprep.subr.bf16.mxu0 0
      %893 = vmatpush1.bf16.msra.mxu0 %v716
      %894 = vmatprep.subr.bf16.mxu0 0
      %895 = vmatpush1.bf16.msra.mxu0 %v717
      %896 = vmatprep.subr.bf16.mxu0 0
      %897 = vmatpush1.bf16.msra.mxu0 %v718
      %898 = vmatprep.subr.bf16.mxu0 0
      %899 = vmatpush1.bf16.msra.mxu0 %v719
      %900 = vmatprep.subr.bf16.mxu0 0
      %901 = vmatpush1.bf16.msra.mxu0 %v720
      %902 = vmatprep.subr.bf16.mxu0 0
      %903 = vmatpush1.bf16.msra.mxu0 %v721
      %904 = vmatprep.subr.bf16.mxu0 0
      %905 = vmatpush1.bf16.msra.mxu0 %v722
      %906 = vmatprep.subr.bf16.mxu0 0
      %907 = vmatpush1.bf16.msra.mxu0 %v723
      %908 = vmatprep.subr.bf16.mxu0 0
      %909 = vmatpush1.bf16.msra.mxu0 %v724
      %910 = vmatprep.subr.bf16.mxu0 0
      %911 = vmatpush1.bf16.msra.mxu0 %v725
      %912 = vmatprep.subr.bf16.mxu0 0
      %913 = vmatpush1.bf16.msra.mxu0 %v726
      %914 = vmatprep.subr.bf16.mxu0 0
      %915 = vmatpush1.bf16.msra.mxu0 %v727
      %916 = vmatprep.subr.bf16.mxu0 0
      %917 = vmatpush1.bf16.msra.mxu0 %v728
      %918 = vmatprep.subr.bf16.mxu0 0
      %919 = vmatpush1.bf16.msra.mxu0 %v729
      %920 = vmatprep.subr.bf16.mxu0 0
      %921 = vmatpush1.bf16.msra.mxu0 %v730
      %922 = vmatprep.subr.bf16.mxu0 0
      %923 = vmatpush1.bf16.msra.mxu0 %v731
      %924 = vmatprep.mubr.bf16.mxu0 %v417
      %925 = vmatmul.mubr.bf16.gmra.mrb[0].mxu0 %v416
      %v926 = vpop.f32.mrb[0].mxu0
      %v927 = vadd.f32 %v887, %v926
      %v928 = vpop.f32.mrb[0].mxu0
      %v929 = vpop.f32.mrb[0].mxu0
      %v930 = vpop.f32.mrb[0].mxu0
      %931 = vdwg.mxu0
      %932 = vmatprep.subr.bf16.mxu0 0
      %933 = vmatpush1.bf16.msra.mxu0 %v732
      %934 = vmatprep.subr.bf16.mxu0 0
      %935 = vmatpush1.bf16.msra.mxu0 %v733
      %936 = vmatprep.subr.bf16.mxu0 0
      %937 = vmatpush1.bf16.msra.mxu0 %v734
      %938 = vmatprep.subr.bf16.mxu0 0
      %939 = vmatpush1.bf16.msra.mxu0 %v735
      %940 = vmatprep.subr.bf16.mxu0 0
      %941 = vmatpush1.bf16.msra.mxu0 %v736
      %942 = vmatprep.subr.bf16.mxu0 0
      %943 = vmatpush1.bf16.msra.mxu0 %v737
      %944 = vmatprep.subr.bf16.mxu0 0
      %945 = vmatpush1.bf16.msra.mxu0 %v738
      %946 = vmatprep.subr.bf16.mxu0 0
      %947 = vmatpush1.bf16.msra.mxu0 %v739
      %948 = vmatprep.subr.bf16.mxu0 0
      %949 = vmatpush1.bf16.msra.mxu0 %v740
      %950 = vmatprep.subr.bf16.mxu0 0
      %951 = vmatpush1.bf16.msra.mxu0 %v741
      %952 = vmatprep.subr.bf16.mxu0 0
      %953 = vmatpush1.bf16.msra.mxu0 %v742
      %954 = vmatprep.subr.bf16.mxu0 0
      %955 = vmatpush1.bf16.msra.mxu0 %v743
      %956 = vmatprep.subr.bf16.mxu0 0
      %957 = vmatpush1.bf16.msra.mxu0 %v744
      %958 = vmatprep.subr.bf16.mxu0 0
      %959 = vmatpush1.bf16.msra.mxu0 %v745
      %960 = vmatprep.subr.bf16.mxu0 0
      %961 = vmatpush1.bf16.msra.mxu0 %v746
      %962 = vmatprep.subr.bf16.mxu0 0
      %963 = vmatpush1.bf16.msra.mxu0 %v747
      %964 = vmatprep.mubr.bf16.mxu0 %v419
      %965 = vmatmul.mubr.bf16.gmra.mrb[0].mxu0 %v418
      %v966 = vpop.f32.mrb[0].mxu0
      %v967 = vadd.f32 %v927, %v966
      %v968 = vpop.f32.mrb[0].mxu0
      %v969 = vpop.f32.mrb[0].mxu0
      %v970 = vpop.f32.mrb[0].mxu0
      %971 = vdwg.mxu0
      %p972 = scmp.eq.s32.totalorder %s21, 0
      %p973 = scmp.eq.s32.totalorder %s22, 0
      %p974 = pnand %p972, %p973
      %p975 = pneg %p974
      // Predicated region
      $region45: #{qrator_forward.1} parent=43 // pred_check
        _
      $region46: #{qrator_forward.1} parent=43 // pred_check_branch
        %977 = sbr.rel (%p974) target = $region48
      $region47: #{qrator_forward.1} parent=43 // pred_region
        %978 = vst [vmem:[#allocation2] sm:$0x1] 0.0
        %979 = vst [vmem:[#allocation3] sm:$0x1] 0.0
      $region48: #{qrator_forward.1} parent=43 // pred_fallthru
        _
      // Predicated region
      $region49: #{qrator_forward.1} parent=43 // pred_check
        %p980 = pneg %p972
      $region50: #{qrator_forward.1} parent=43 // pred_check_branch
        %982 = sbr.rel (%p980) target = $region52
      $region51: #{qrator_forward.1} parent=43 // pred_region
        %v983 = vld [vmem:[#allocation2] sm:$0x1]
        %v984 = vrot.slane %v967, 4
        %v985 = vadd.f32 %v967, %v984
        %v986 = vrot.slane %v985, 2
        %v987 = vadd.f32 %v985, %v986
        %v988 = vrot.slane %v987, 1
        %v989 = vadd.f32 %v987, %v988
        %v990 = vadd.f32 %v983, %v989
        %991 = vst [vmem:[#allocation2] sm:$0x1] %v990
        %v992 = vld [vmem:[#allocation3] sm:$0x1]
        %v993 = vmul.f32 %v967, %v967
        %v994 = vrot.slane %v993, 4
        %v995 = vadd.f32 %v993, %v994
        %v996 = vrot.slane %v995, 2
        %v997 = vadd.f32 %v995, %v996
        %v998 = vrot.slane %v997, 1
        %v999 = vadd.f32 %v997, %v998
        %v1000 = vadd.f32 %v992, %v999
        %1001 = vst [vmem:[#allocation3] sm:$0x1] %v1000
      $region52: #{qrator_forward.1} parent=43 // pred_fallthru
        _
      %p1002 = scmp.eq.s32.totalorder %s21, 1
      // Predicated region
      $region53: #{qrator_forward.1} parent=43 // pred_check
        %p1003 = pneg %p1002
      $region54: #{qrator_forward.1} parent=43 // pred_check_branch
        %1005 = sbr.rel (%p1003) target = $region56
      $region55: #{qrator_forward.1} parent=43 // pred_region
        %v1006 = vld [vmem:[#allocation2] sm:$0x1]
        %v1007 = vrcp.pop 8.0
        %v1008 = vmul.f32 %v1006, %v1007
        %v1009 = vld [vmem:[#allocation3] sm:$0x1]
        %v1010 = vmul.f32 %v1009, %v1007
        %v1011 = vmul.f32 %v1008, %v1008
        %v1012 = vsub.f32 %v1010, %v1011
        %v1013 = vmax.f32 %v1012, 0.0
        %v1014 = vld [vmem:[%s2] sm:$0x1]
        %v1015 = vadd.f32 %v1013, 1e-05
        %v1016 = vrsqrt.pop %v1015
        %v1017 = vmul.f32 %v1014, %v1016
        %v1018 = vld [vmem:[%s3] sm:$0x1]
        %v1019 = vmul.f32 %v1008, %v1017
        %v1020 = vsub.f32 %v1018, %v1019
        %v1022 = vlaneseq
        %v1023 = vshrl.u32 %v1022, 7
        %v1024 = vsub.s32 0, %v1023
        %v1025 = vrot.slane %v1017, %v1024
        %v1027 = vmul.f32 %v967, %v1025
        %v1029 = vlaneseq
        %v1030 = vshrl.u32 %v1029, 7
        %v1031 = vsub.s32 0, %v1030
        %v1032 = vrot.slane %v1020, %v1031
        %v1034 = vadd.f32 %v1027, %v1032
        %vm1035 = vcmp.ge.f32.partialorder %v1034, 0.0
        %v1036 = vmul.f32 %v1034, 0.1
        %v1037 = vsel %vm1035, %v1034, %v1036
        %v1038 = vld [vmem:[%s4] sm:$0xff]
        %v1039 = vld [vmem:[%s4 + $0x8] sm:$0xff]
        %v1040 = vld [vmem:[%s4 + $0x10] sm:$0xff]
        %v1041 = vld [vmem:[%s4 + $0x18] sm:$0xff]
        %v1042 = vld [vmem:[%s4 + $0x20] sm:$0xff]
        %v1043 = vld [vmem:[%s4 + $0x28] sm:$0xff]
        %v1044 = vld [vmem:[%s4 + $0x30] sm:$0xff]
        %v1045 = vld [vmem:[%s4 + $0x38] sm:$0xff]
        %v1046 = vld [vmem:[%s4 + $0x40] sm:$0xff]
        %v1047 = vld [vmem:[%s4 + $0x48] sm:$0xff]
        %v1048 = vld [vmem:[%s4 + $0x50] sm:$0xff]
        %v1049 = vld [vmem:[%s4 + $0x58] sm:$0xff]
        %v1050 = vld [vmem:[%s4 + $0x60] sm:$0xff]
        %v1051 = vld [vmem:[%s4 + $0x68] sm:$0xff]
        %v1052 = vld [vmem:[%s4 + $0x70] sm:$0xff]
        %v1053 = vld [vmem:[%s4 + $0x78] sm:$0xff]
        %v1054 = vld [vmem:[%s5] sm:$0x1]
        %v1056 = vlaneseq
        %v1057 = vshrl.u32 %v1056, 7
        %v1058 = vsub.s32 0, %v1057
        %v1059 = vrot.slane %v1054, %v1058
        %1061 = vmatprep.subr.mxu0 0.0
        %1062 = vmatpush1.msra.mxu0 %v1038
        %1063 = vmatprep.subr.mxu0 0.0
        %1064 = vmatpush1.msra.mxu0 %v1039
        %1065 = vmatprep.subr.mxu0 0.0
        %1066 = vmatpush1.msra.mxu0 %v1040
        %1067 = vmatprep.subr.mxu0 0.0
        %1068 = vmatpush1.msra.mxu0 %v1041
        %1069 = vmatprep.subr.mxu0 0.0
        %1070 = vmatpush1.msra.mxu0 %v1042
        %1071 = vmatprep.subr.mxu0 0.0
        %1072 = vmatpush1.msra.mxu0 %v1043
        %1073 = vmatprep.subr.mxu0 0.0
        %1074 = vmatpush1.msra.mxu0 %v1044
        %1075 = vmatprep.subr.mxu0 0.0
        %1076 = vmatpush1.msra.mxu0 %v1045
        %1077 = vmatprep.subr.mxu0 0.0
        %1078 = vmatpush1.msra.mxu0 %v1046
        %1079 = vmatprep.subr.mxu0 0.0
        %1080 = vmatpush1.msra.mxu0 %v1047
        %1081 = vmatprep.subr.mxu0 0.0
        %1082 = vmatpush1.msra.mxu0 %v1048
        %1083 = vmatprep.subr.mxu0 0.0
        %1084 = vmatpush1.msra.mxu0 %v1049
        %1085 = vmatprep.subr.mxu0 0.0
        %1086 = vmatpush1.msra.mxu0 %v1050
        %1087 = vmatprep.subr.mxu0 0.0
        %1088 = vmatpush1.msra.mxu0 %v1051
        %1089 = vmatprep.subr.mxu0 0.0
        %1090 = vmatpush1.msra.mxu0 %v1052
        %1091 = vmatprep.subr.mxu0 0.0
        %1092 = vmatpush1.msra.mxu0 %v1053
        %1093 = vmatprep.subr.mxu0 0.0
        %1094 = vmatpush1.msra.mxu0 0.0
        %1095 = vmatprep.subr.mxu0 0.0
        %1096 = vmatpush1.msra.mxu0 0.0
        %1097 = vmatprep.subr.mxu0 0.0
        %1098 = vmatpush1.msra.mxu0 0.0
        %1099 = vmatprep.subr.mxu0 0.0
        %1100 = vmatpush1.msra.mxu0 0.0
        %1101 = vmatprep.subr.mxu0 0.0
        %1102 = vmatpush1.msra.mxu0 0.0
        %1103 = vmatprep.subr.mxu0 0.0
        %1104 = vmatpush1.msra.mxu0 0.0
        %1105 = vmatprep.subr.mxu0 0.0
        %1106 = vmatpush1.msra.mxu0 0.0
        %1107 = vmatprep.subr.mxu0 0.0
        %1108 = vmatpush1.msra.mxu0 0.0
        %1109 = vmatprep.subr.mxu0 0.0
        %1110 = vmatpush1.msra.mxu0 0.0
        %1111 = vmatprep.subr.mxu0 0.0
        %1112 = vmatpush1.msra.mxu0 0.0
        %1113 = vmatprep.subr.mxu0 0.0
        %1114 = vmatpush1.msra.mxu0 0.0
        %1115 = vmatprep.subr.mxu0 0.0
        %1116 = vmatpush1.msra.mxu0 0.0
        %1117 = vmatprep.subr.mxu0 0.0
        %1118 = vmatpush1.msra.mxu0 0.0
        %1119 = vmatprep.subr.mxu0 0.0
        %1120 = vmatpush1.msra.mxu0 0.0
        %1121 = vmatprep.subr.mxu0 0.0
        %1122 = vmatpush1.msra.mxu0 0.0
        %1123 = vmatprep.subr.mxu0 0.0
        %1124 = vmatpush1.msra.mxu0 0.0
        %1125 = vmatprep.mubr.f32.mxu0 0.0
        %1126 = vmatmul.mubr.f32.gmra.mrb[0].mxu0 %v1037
        %v1127 = vpop.f32.mrb[0].mxu0
        %v1128 = vadd.f32 %v1059, %v1127
        %v1129 = vpop.f32.mrb[0].mxu0
        %1130 = vdwg.mxu0
        %1131 = vst [vmem:[%s265] sm:$0xff] %v1128
      $region56: #{qrator_forward.1} parent=43 // pred_fallthru
        _
      %s1132 = smul.u32 %s22, %s21
      %p1133 = scmp.lt.s32.totalorder %s1132, 0
      %s1134 = scalar_select %p1133, %s1132, 0
      %s1135 = smul.addr %s1134, 8
      %s1136 = scalar_lea.vmem %s6, %s1135
      // Predicated region
      $region57: #{qrator_forward.1} parent=43 // pred_check
        %p1137 = pneg %p180
      $region58: #{qrator_forward.1} parent=43 // pred_check_branch
        %1139 = sbr.rel (%p1137) target = $region60
      $region59: #{qrator_forward.1} parent=43 // pred_region
        %s1140 = smul.u32 %s22, %s21
      $region60: #{qrator_forward.1} parent=43 // pred_fallthru
        _
    $region44: #{qrator_forward.1} parent=5 // pred_fallthru
      _
    %p1141 = scmp.le.s32.totalorder 2, %s12
    // Predicated region
    $region61: #{qrator_forward.1} parent=5 // pred_check
      %p1142 = pneg %p1141
    $region62: #{qrator_forward.1} parent=5 // pred_check_branch
      %1144 = sbr.rel (%p1142) target = $region64
    $region63: #{qrator_forward.1} parent=5 // pred_region
      %s1145 = ssub.s32 %s12, 2
      // Predicated region
      $region65: #{qrator_forward.1} parent=63 // pred_check
        %p1146 = pneg %p186
      $region66: #{qrator_forward.1} parent=63 // pred_check_branch
        %1148 = sbr.rel (%p1146) target = $region68
      $region67: #{qrator_forward.1} parent=63 // pred_region
        %s1149 = smul.u32 %s24, %s23
        %p1150 = scmp.lt.s32.totalorder %s1149, 0
        %s1151 = scalar_select %p1150, %s1149, 0
        %s1152 = smul.addr %s1151, 8
        %s1153 = scalar_lea.vmem %s6, %s1152
      $region68: #{qrator_forward.1} parent=63 // pred_fallthru
        _
    $region64: #{qrator_forward.1} parent=5 // pred_fallthru
      _
  $region6: #{qrator_forward.1} parent=0 // loop_footer
    %s16 = sadd.s32 1, %s12
  $region7: #{qrator_forward.1} parent=0 // loop_footer_branch
    %11 = sbr.rel target = $region3
  $region8: #{qrator_forward.1} parent=0 // loop_exit
    _

</llo_original>
